<compile_context>
chip_gen: v5e
topology: v5e:2x2
jax: 0.10.0
libtpu: 0.0.40
codegen_flags: <defaults>
</compile_context>

<pallas_src>
import math

import jax
import jax.numpy as jnp
from jax.experimental import pallas as pl
from jax.experimental.pallas import tpu as pltpu

LANES = 128      # vreg lane width; last slab dim maps onto it (unmasked vst)
GRANULE = 32     # row-tile granule: multiple of packed sublanes for 8/16/32-bit


def _sq_err_kernel(logits_ref, y_ref, out_ref):
    # Cast inside the kernel (free on the VPU) instead of a wrapper-side
    # .astype() that would cost a full extra HBM read+write per input.
    l = logits_ref[...].astype(out_ref.dtype)
    t = y_ref[...].astype(out_ref.dtype)
    d = l - t
    out_ref[...] = d * d


def _target_block_bytes():
    """Per-generation block size (per array, per pipeline buffer)."""
    try:
        kind = jax.devices()[0].device_kind.lower()
    except Exception:  # pragma: no cover - defensive; default is safe everywhere
        kind = ""
    # v6e / v7x: 32 MiB default scoped VMEM -> 4 MiB blocks (3 x 2 x 4 = 24 MiB).
    if "v6" in kind or "v7" in kind:
        return 4 * 1024 * 1024
    # v5e & older / unknown: 16 MiB default scoped VMEM -> 2 MiB blocks (12 MiB).
    return 2 * 1024 * 1024


def criterion(logits, y):
    """Elementwise squared error (logits - y) ** 2 with NumPy-style broadcasting."""
    out_shape = jnp.broadcast_shapes(logits.shape, y.shape)
    out_dtype = jnp.result_type(logits.dtype, y.dtype)

    n = math.prod(out_shape) if out_shape else 1
    if n == 0:
        return jnp.zeros(out_shape, out_dtype)

    # Only materialize a broadcast when shapes actually differ (rare for a
    # criterion).  Never materialize a wrapper-side dtype cast.
    # TODO(synk): express same-rank size-1 broadcasts via BlockSpec index_map
    # (block 0 on the broadcast dims) to avoid this copy in the broadcast case.
    lb = logits if logits.shape == out_shape else jnp.broadcast_to(logits, out_shape)
    yb = y if y.shape == out_shape else jnp.broadcast_to(y, out_shape)

    rows = n // LANES           # 128-aligned bulk
    n_bulk = rows * LANES
    n_tail = n - n_bulk         # < 128 ragged tail (handled by a tiny JAX op)

    if rows == 0:
        # Tiny input: a kernel launch is pure overhead.
        return ((lb.astype(out_dtype) - yb.astype(out_dtype)) ** 2).reshape(out_shape)

    lf = lb.reshape(-1)
    yf = yb.reshape(-1)
    if n_tail == 0:
        l2 = lf.reshape(rows, LANES)
        y2 = yf.reshape(rows, LANES)
    else:
        l2 = lf[:n_bulk].reshape(rows, LANES)
        y2 = yf[:n_bulk].reshape(rows, LANES)

    l_item = jnp.dtype(lb.dtype).itemsize
    y_item = jnp.dtype(yb.dtype).itemsize
    o_item = jnp.dtype(out_dtype).itemsize
    max_item = max(l_item, y_item, o_item)

    # Row tile from the per-generation block-byte budget, rounded to GRANULE.
    tile_rows = max(GRANULE, _target_block_bytes() // (LANES * max_item))
    tile_rows = (tile_rows // GRANULE) * GRANULE

    if rows <= GRANULE:
        # Single tiny full-extent block (block_shape == full array dims is legal).
        tr = rows
    else:
        # Guarantee >= 2 grid steps so the "parallel" grid axis can shard
        # across v7x's two TensorCores (and pipelining has something to overlap).
        half_rows = ((rows + 1) // 2 + GRANULE - 1) // GRANULE * GRANULE
        tr = min(tile_rows, half_rows)
    grid = (pl.cdiv(rows, tr),)   # partial last block is masked by Pallas

    out_bulk = pl.pallas_call(
        _sq_err_kernel,
        out_shape=jax.ShapeDtypeStruct((rows, LANES), out_dtype),
        grid_spec=pltpu.PrefetchScalarGridSpec(
            num_scalar_prefetch=0,
            grid=grid,
            in_specs=[
                pl.BlockSpec((tr, LANES), lambda i: (i, 0)),
                pl.BlockSpec((tr, LANES), lambda i: (i, 0)),
            ],
            out_specs=pl.BlockSpec((tr, LANES), lambda i: (i, 0)),
        ),
        compiler_params=pltpu.CompilerParams(
            dimension_semantics=("parallel",),
        ),
        cost_estimate=pl.CostEstimate(
            flops=2 * n_bulk,
            transcendentals=0,
            bytes_accessed=n_bulk * (l_item + y_item + o_item),
        ),
    )(l2, y2)

    if n_tail == 0:
        return out_bulk.reshape(out_shape)

    # Ragged tail (< 128 elements): tiny JAX op, no full-array pad/slice.
    tail = (lf[n_bulk:].astype(out_dtype) - yf[n_bulk:].astype(out_dtype)) ** 2
    return jnp.concatenate([out_bulk.reshape(-1), tail]).reshape(out_shape)


if __name__ == "__main__":
    key = jax.random.PRNGKey(0)
    k1, k2, k3, k4 = jax.random.split(key, 4)

    # Small shapes consistent with a generic logits/target pair.
    B, C, H, W = 2, 4, 16, 16
    logits = jax.random.normal(k1, (B, C, H, W), dtype=jnp.float32)
    y = jax.random.normal(k2, (B, C, H, W), dtype=jnp.float32)

    out = criterion(logits, y)
    jax.block_until_ready(out)

    ref = (logits - y) ** 2
    assert out.shape == ref.shape
    assert out.dtype == ref.dtype
    assert jnp.allclose(out, ref, atol=1e-6), "mismatch vs reference (aligned case)"

    # Also exercise the ragged-tail path (n % 128 != 0).
    a = jax.random.normal(k3, (5, 37), dtype=jnp.float32)
    b = jax.random.normal(k4, (5, 37), dtype=jnp.float32)
    out2 = criterion(a, b)
    jax.block_until_ready(out2)
    ref2 = (a - b) ** 2
    assert out2.shape == ref2.shape
    assert jnp.allclose(out2, ref2, atol=1e-6), "mismatch vs reference (ragged case)"

    print("KERNEL_OK")
</pallas_src>

<mosaic_0001>
module attributes {stable_mosaic.version = 11 : i64} {
  func.func @_sq_err_kernel(%arg0: i32, %arg1: memref<16x128xf32, #tpu.memory_space<vmem>>, %arg2: memref<16x128xf32, #tpu.memory_space<vmem>>, %arg3: memref<16x128xf32, #tpu.memory_space<vmem>>) attributes {dimension_semantics = [#tpu.dimension_semantics<parallel>], iteration_bounds = array<i64: 1>, scalar_prefetch = 0 : i64, scratch_operands = 0 : i64, tpu.core_type = #tpu.core_type<tc>, window_params = [{transform_indices = @transform_0, window_bounds = array<i64: 16, 128>}, {transform_indices = @transform_1, window_bounds = array<i64: 16, 128>}, {transform_indices = @transform_2, window_bounds = array<i64: 16, 128>}]} {
    %c0 = arith.constant 0 : index
    %c0_0 = arith.constant 0 : index
    %0 = vector.load %arg1[%c0, %c0_0] : memref<16x128xf32, #tpu.memory_space<vmem>>, vector<16x128xf32>
    %c0_1 = arith.constant 0 : index
    %c0_2 = arith.constant 0 : index
    %1 = vector.load %arg2[%c0_1, %c0_2] : memref<16x128xf32, #tpu.memory_space<vmem>>, vector<16x128xf32>
    %2 = arith.subf %0, %1 : vector<16x128xf32>
    %3 = arith.mulf %2, %2 : vector<16x128xf32>
    %c0_3 = arith.constant 0 : index
    %c0_4 = arith.constant 0 : index
    %4 = vector.load %arg3[%c0_3, %c0_4] : memref<16x128xf32, #tpu.memory_space<vmem>>, vector<16x128xf32>
    tpu.vector_store %arg3[%c0_3, %c0_4], %3 {strides = array<i32>} : memref<16x128xf32, #tpu.memory_space<vmem>>, vector<16x128xf32>,
    return
  }
  func.func @transform_0(%arg0: i32) -> (i32, i32) {
    %c0_i32 = arith.constant 0 : i32
    %c0_i32_0 = arith.constant 0 : i32
    return %arg0, %c0_i32 : i32, i32
  }
  func.func @transform_1(%arg0: i32) -> (i32, i32) {
    %c0_i32 = arith.constant 0 : i32
    %c0_i32_0 = arith.constant 0 : i32
    return %arg0, %c0_i32 : i32, i32
  }
  func.func @transform_2(%arg0: i32) -> (i32, i32) {
    %c0_i32 = arith.constant 0 : i32
    %c0_i32_0 = arith.constant 0 : i32
    return %arg0, %c0_i32 : i32, i32
  }
}

</mosaic_0001>

<llo_original>
// kernel: tpu_custom_call.1
$region0: #{tpu_custom_call.1}
  #allocation0 [shape = 'u32[]', space=smem, size = 0x4, offset = 0x4, fixed_abs, tag = 'smem constant byte address 0x4 - core index']
  #allocation1 [shape = 'u32[72,128]{1,0:T(1,128)}', space=vmem, size = 0x9000, scoped, tag = 'internal scratch']
  %s0 = inlined_call_operand.hbm [shape: f32[16,128], index: 0, kind: input, shape index: {}]
  %s1 = inlined_call_operand.hbm [shape: f32[16,128], index: 1, kind: input, shape index: {}]
  %s2 = inlined_call_operand.hbm [shape: f32[16,128], index: 2, kind: output, shape index: {}]
  %s3 = sld [smem:[#allocation0]]
  $region26: #{tpu_custom_call.1} parent=0
    _
  %s5 = ssub.s32 1, %s3
  %s6 = scalar_select 0, %s5, %s3
  $region1: #{tpu_custom_call.1} parent=0
    #allocation2 [shape = 'u8[8192]{0}', space=vmem, size = 0x2000, scoped, tag = 'input window, operand 0, single buffered']
    #allocation3 [shape = 's32[1]{0}', space=sflag, size = 0x4, scoped, tag = 'scoped memory for tpu_custom_call.1']
    #allocation4 [shape = 's32[1]{0}', space=sflag, size = 0x4, scoped, tag = 'scoped memory for tpu_custom_call.1']
    #allocation5 [shape = 'u8[8192]{0}', space=vmem, size = 0x2000, scoped, tag = 'input window, operand 1, single buffered']
    #allocation6 [shape = 's32[1]{0}', space=sflag, size = 0x4, scoped, tag = 'scoped memory for tpu_custom_call.1']
    #allocation7 [shape = 'u8[8192]{0}', space=vmem, size = 0x2000, scoped, tag = 'output window, operand 0, single buffered']
    %7 = vsyncpa [#allocation3], 0
    %8 = vsyncpa [#allocation6], 0
    %9 = vsyncpa [#allocation4], 0
    // Predicated region
    $region2: #{tpu_custom_call.1} parent=1 // pred_check
      _
    $region3: #{tpu_custom_call.1} parent=1 // pred_check_branch
      %11 = sbr.rel (0) target = $region5
    $region4: #{tpu_custom_call.1} parent=1 // pred_region
      %13 = vsyncadd [#allocation3], 0
      %s14 = sshll.u32 %s0, 4
      %s15 = int_to_ptr.hbm [resolvable:$true] %s14
      %s16 = sshll.u32 [#allocation2], 4
      %s17 = int_to_ptr.vmem [resolvable:$true] %s16
      %22 = dma.hbm_to_vmem [thread:$0]  %s15, 256, %s17, [#allocation3], 128, 128, 8
    $region5: #{tpu_custom_call.1} parent=1 // pred_fallthru
      _
    // Predicated region
    $region6: #{tpu_custom_call.1} parent=1 // pred_check
      _
    $region7: #{tpu_custom_call.1} parent=1 // pred_check_branch
      %24 = sbr.rel (0) target = $region9
    $region8: #{tpu_custom_call.1} parent=1 // pred_region
      %26 = vsyncadd [#allocation6], 0
      %s27 = sshll.u32 %s1, 4
      %s28 = int_to_ptr.hbm [resolvable:$true] %s27
      %s29 = sshll.u32 [#allocation5], 4
      %s30 = int_to_ptr.vmem [resolvable:$true] %s29
      %35 = dma.hbm_to_vmem [thread:$0]  %s28, 256, %s30, [#allocation6], 128, 128, 8
    $region9: #{tpu_custom_call.1} parent=1 // pred_fallthru
      _
    // Predicated region
    $region10: #{tpu_custom_call.1} parent=1 // pred_check
      _
    $region11: #{tpu_custom_call.1} parent=1 // pred_check_branch
      %37 = sbr.rel (0) target = $region13
    $region12: #{tpu_custom_call.1} parent=1 // pred_region
      %39 = dma.done [#allocation3], 256
    $region13: #{tpu_custom_call.1} parent=1 // pred_fallthru
      _
    // Predicated region
    $region14: #{tpu_custom_call.1} parent=1 // pred_check
      _
    $region15: #{tpu_custom_call.1} parent=1 // pred_check_branch
      %41 = sbr.rel (0) target = $region17
    $region16: #{tpu_custom_call.1} parent=1 // pred_region
      %43 = dma.done [#allocation6], 256
    $region17: #{tpu_custom_call.1} parent=1 // pred_fallthru
      _
    %v44 = vld [vmem:[#allocation2] sm:$0xff]
    %v45 = vld [vmem:[#allocation2 + $0x8] sm:$0xff]
    %v46 = vld [vmem:[#allocation5] sm:$0xff]
    %v47 = vld [vmem:[#allocation5 + $0x8] sm:$0xff]
    %v48 = vsub.f32 %v44, %v46
    %v49 = vsub.f32 %v45, %v47
    %v50 = vmul.f32 %v48, %v48
    %v51 = vmul.f32 %v49, %v49
    %52 = vst [vmem:[#allocation7] sm:$0xff] %v50
    %53 = vst [vmem:[#allocation7 + $0x8] sm:$0xff] %v51
    // Predicated region
    $region18: #{tpu_custom_call.1} parent=1 // pred_check
      _
    $region19: #{tpu_custom_call.1} parent=1 // pred_check_branch
      %55 = sbr.rel (0) target = $region21
    $region20: #{tpu_custom_call.1} parent=1 // pred_region
      %57 = vsyncadd [#allocation4], 0
      %s58 = sshll.u32 [#allocation7], 4
      %s59 = int_to_ptr.vmem [resolvable:$true] %s58
      %s60 = sshll.u32 %s2, 4
      %s61 = int_to_ptr.hbm [resolvable:$true] %s60
      %66 = dma.vmem_to_hbm [thread:$0]  %s59, 256, %s61, [#allocation4], 128, 128, 8
    $region21: #{tpu_custom_call.1} parent=1 // pred_fallthru
      _
    // Predicated region
    $region22: #{tpu_custom_call.1} parent=1 // pred_check
      _
    $region23: #{tpu_custom_call.1} parent=1 // pred_check_branch
      %68 = sbr.rel (0) target = $region25
    $region24: #{tpu_custom_call.1} parent=1 // pred_region
      %70 = dma.done [#allocation4], 256
    $region25: #{tpu_custom_call.1} parent=1 // pred_fallthru
      _
    %71 = vsyncpa [#allocation3], 1
    %72 = vsyncpa [#allocation6], 1
    %73 = vsyncpa [#allocation4], 1

</llo_original>
